<compile_context>
chip_gen: v7x
topology: tpu7x:2x2x1
jax: 0.10.0
libtpu: 0.0.40
codegen_flags: <defaults>
</compile_context>

<pallas_src>
import jax
import jax.numpy as jnp
from jax.experimental import pallas as pl
from jax.experimental.pallas import tpu as pltpu

_SINGLE_BLOCK_BYTES = 2 * 1024 * 1024   # below this, one block is cheapest
_TAIL_LANE = 1024                       # lane width used for the ragged path


def _logical_or_ge_ne_kernel(x_ref, y_ref, o_ref):
    x = x_ref[...]
    y = y_ref[...]
    o_ref[...] = jnp.logical_or(x >= y, x != y)


def _max_block_rows(lane):
    """Per-generation block-size cap (~4 MiB on v6e/v7x, ~2 MiB on v5e)."""
    try:
        kind = jax.devices()[0].device_kind.lower()
    except Exception:
        kind = ""
    target_bytes = 2 * 1024 * 1024 if "v5" in kind else 4 * 1024 * 1024
    return max(8, (target_bytes // (lane * 4)) // 8 * 8)


def _choose_block_rows(rows, lane):
    if rows * lane * 4 <= _SINGLE_BLOCK_BYTES:
        return rows                      # tiny: single full-array block
    # Guarantee >= 2 grid steps so v7x's two TensorCores both get work.
    half = -(-rows // 2)
    half = -(-half // 8) * 8             # keep block sublane-aligned
    return max(8, min(_max_block_rows(lane), half))


def _pick_lane(shape, total):
    """A lane width (multiple of 128) that divides `total`, or None."""
    last = shape[-1] if len(shape) else 1
    if last % 128 == 0 and 128 <= last <= 8192 and total % last == 0:
        return last                      # cheapest reshape: keep natural last dim
    for lane in (1024, 512, 256, 128):
        if total % lane == 0:
            return lane
    return None


def _run_2d(x2, y2, *, block_rows=None):
    rows, lane = x2.shape
    total = rows * lane
    br = _choose_block_rows(rows, lane) if block_rows is None else block_rows
    br = min(br, rows)
    if br < rows:                        # tiled along rows -> sublane-align block
        br = max(8, (br // 8) * 8)
    grid = (pl.cdiv(rows, br),)          # Pallas masks the partial last block
    cost = pl.CostEstimate(
        flops=3 * total,                               # 2 compares + 1 or
        transcendentals=0,
        bytes_accessed=2 * 4 * total + total,          # 2 f32 reads + 1B write
    )
    return pl.pallas_call(
        _logical_or_ge_ne_kernel,
        out_shape=jax.ShapeDtypeStruct((rows, lane), jnp.bool_),
        grid=grid,
        in_specs=[
            pl.BlockSpec((br, lane), lambda i: (i, 0)),
            pl.BlockSpec((br, lane), lambda i: (i, 0)),
        ],
        out_specs=pl.BlockSpec((br, lane), lambda i: (i, 0)),
        compiler_params=pltpu.CompilerParams(
            dimension_semantics=("parallel",),   # shard steps across TCs (v7x)
        ),
        cost_estimate=cost,
    )(x2, y2)


def logical_or_ge_ne(x, y, *, block_rows=None):
    """out = (x >= y) | (x != y), elementwise, bool, same shape as x."""
    assert x.shape == y.shape, "kernel assumes equal input shapes (no broadcasting)"
    orig_shape = x.shape
    total = int(x.size)
    if total == 0:
        return jnp.zeros(orig_shape, jnp.bool_)

    lane = _pick_lane(orig_shape, total)
    if lane is not None:
        rows = total // lane
        out2 = _run_2d(x.reshape(rows, lane), y.reshape(rows, lane),
                       block_rows=block_rows)
        return out2.reshape(orig_shape)

    # Ragged element count (not a multiple of 128): run the kernel over the
    # lane-aligned bulk and compute the short (< lane) tail with plain jnp.
    lane = _TAIL_LANE
    bulk = (total // lane) * lane
    xf = x.reshape(-1)
    yf = y.reshape(-1)
    if bulk == 0:
        # Tiny ragged input: one fused XLA elementwise op is already optimal.
        return jnp.logical_or(xf >= yf, xf != yf).reshape(orig_shape)
    out_bulk = _run_2d(xf[:bulk].reshape(bulk // lane, lane),
                       yf[:bulk].reshape(bulk // lane, lane),
                       block_rows=block_rows).reshape(-1)
    out_tail = jnp.logical_or(xf[bulk:] >= yf[bulk:], xf[bulk:] != yf[bulk:])
    return jnp.concatenate([out_bulk, out_tail]).reshape(orig_shape)


if __name__ == "__main__":
    key = jax.random.PRNGKey(0)
    kx, ky, kx2, ky2, kx3, ky3 = jax.random.split(key, 6)

    # Case 1: small NCHW, total is a multiple of 1024 -> pure reshape path,
    # single full-array block.
    shape1 = (2, 4, 16, 16)
    x1 = jax.random.normal(kx, shape1, dtype=jnp.float32)
    y1 = jax.random.normal(ky, shape1, dtype=jnp.float32)
    y1 = y1.at[0, 0, :4, :4].set(x1[0, 0, :4, :4])   # force exact equalities
    o1 = logical_or_ge_ne(x1, y1)
    jax.block_until_ready(o1)
    r1 = jnp.logical_or(x1 >= y1, x1 != y1)
    assert o1.dtype == jnp.bool_ and o1.shape == shape1
    assert bool(jnp.all(o1 == r1))

    # Case 2: ragged element count (1155) -> kernel on the 1024-element bulk,
    # plain-jnp tail, no padding of the inputs.
    shape2 = (3, 5, 7, 11)
    x2 = jax.random.normal(kx2, shape2, dtype=jnp.float32)
    y2 = jax.random.normal(ky2, shape2, dtype=jnp.float32)
    y2 = y2.at[1, 2, :3, :3].set(x2[1, 2, :3, :3])
    o2 = logical_or_ge_ne(x2, y2)
    jax.block_until_ready(o2)
    r2 = jnp.logical_or(x2 >= y2, x2 != y2)
    assert o2.dtype == jnp.bool_ and o2.shape == shape2
    assert bool(jnp.all(o2 == r2))

    # Case 3: natural 128-wide last dim, forced small block_rows so the grid
    # has multiple steps and a masked partial last block (rows=320, block=128).
    shape3 = (2, 4, 40, 128)
    x3 = jax.random.normal(kx3, shape3, dtype=jnp.float32)
    y3 = jax.random.normal(ky3, shape3, dtype=jnp.float32)
    y3 = y3.at[1, 3, :5, :16].set(x3[1, 3, :5, :16])
    o3 = logical_or_ge_ne(x3, y3, block_rows=128)
    jax.block_until_ready(o3)
    r3 = jnp.logical_or(x3 >= y3, x3 != y3)
    assert o3.dtype == jnp.bool_ and o3.shape == shape3
    assert bool(jnp.all(o3 == r3))

    print("KERNEL_OK")
</pallas_src>

<mosaic_0001>
module attributes {stable_mosaic.version = 11 : i64} {
  func.func @_logical_or_ge_ne_kernel(%arg0: i32, %arg1: memref<2x1024xf32, #tpu.memory_space<vmem>>, %arg2: memref<2x1024xf32, #tpu.memory_space<vmem>>, %arg3: memref<2x1024xi32, #tpu.memory_space<vmem>>) attributes {dimension_semantics = [#tpu.dimension_semantics<parallel>], iteration_bounds = array<i64: 1>, scalar_prefetch = 0 : i64, scratch_operands = 0 : i64, tpu.core_type = #tpu.core_type<tc>, window_params = [{transform_indices = @transform_0, window_bounds = array<i64: 2, 1024>}, {transform_indices = @transform_1, window_bounds = array<i64: 2, 1024>}, {transform_indices = @transform_2, window_bounds = array<i64: 2, 1024>}]} {
    %c0 = arith.constant 0 : index
    %c0_0 = arith.constant 0 : index
    %0 = vector.load %arg1[%c0, %c0_0] : memref<2x1024xf32, #tpu.memory_space<vmem>>, vector<2x1024xf32>
    %c0_1 = arith.constant 0 : index
    %c0_2 = arith.constant 0 : index
    %1 = vector.load %arg2[%c0_1, %c0_2] : memref<2x1024xf32, #tpu.memory_space<vmem>>, vector<2x1024xf32>
    %2 = arith.cmpf oge, %0, %1 : vector<2x1024xf32>
    %3 = arith.cmpf one, %0, %1 : vector<2x1024xf32>
    %4 = arith.ori %2, %3 : vector<2x1024xi1>
    %c0_3 = arith.constant 0 : index
    %c0_4 = arith.constant 0 : index
    %5 = vector.load %arg3[%c0_3, %c0_4] : memref<2x1024xi32, #tpu.memory_space<vmem>>, vector<2x1024xi32>
    %6 = arith.extui %4 : vector<2x1024xi1> to vector<2x1024xi32>
    %cst = arith.constant dense<0> : vector<2x1024xi32>
    %7 = arith.cmpi ne, %5, %cst : vector<2x1024xi32>
    tpu.vector_store %arg3[%c0_3, %c0_4], %6 {strides = array<i32>} : memref<2x1024xi32, #tpu.memory_space<vmem>>, vector<2x1024xi32>,
    return
  }
  func.func @transform_0(%arg0: i32) -> (i32, i32) {
    %c0_i32 = arith.constant 0 : i32
    %c0_i32_0 = arith.constant 0 : i32
    return %arg0, %c0_i32 : i32, i32
  }
  func.func @transform_1(%arg0: i32) -> (i32, i32) {
    %c0_i32 = arith.constant 0 : i32
    %c0_i32_0 = arith.constant 0 : i32
    return %arg0, %c0_i32 : i32, i32
  }
  func.func @transform_2(%arg0: i32) -> (i32, i32) {
    %c0_i32 = arith.constant 0 : i32
    %c0_i32_0 = arith.constant 0 : i32
    return %arg0, %c0_i32 : i32, i32
  }
}

</mosaic_0001>

<llo_original>
// kernel: tpu_custom_call.1
$region0: #{tpu_custom_call.1}
  #allocation0 [shape = 'u32[]', space=smem, size = 0x4, offset = 0x4, fixed_abs, tag = 'smem constant byte address 0x4 - core index']
  #allocation1 [shape = 'u32[144,128]{1,0:T(1,128)}', space=vmem, size = 0x12000, scoped, tag = 'internal scratch']
  %s0 = inlined_call_operand.hbm [shape: f32[2,1024], index: 0, kind: input, shape index: {}]
  %s1 = inlined_call_operand.hbm [shape: f32[2,1024], index: 1, kind: input, shape index: {}]
  %s2 = inlined_call_operand.vmem [shape: s32[2,1024], index: 2, kind: output, shape index: {}]
  %s3 = sld [smem:[#allocation0]]
  $region26: #{tpu_custom_call.1} parent=0
    _
  %s5 = ssub.s32 1, %s3
  %s6 = scalar_select 0, %s5, %s3
  $region1: #{tpu_custom_call.1} parent=0
    #allocation2 [shape = 'u8[8192]{0}', space=vmem, size = 0x2000, scoped, tag = 'input window, operand 0, single buffered']
    #allocation3 [shape = 's32[1]{0}', space=sflag, size = 0x4, scoped, tag = 'scoped memory for tpu_custom_call.1']
    #allocation4 [shape = 'u8[8192]{0}', space=vmem, size = 0x2000, scoped, tag = 'input window, operand 1, single buffered']
    #allocation5 [shape = 's32[1]{0}', space=sflag, size = 0x4, scoped, tag = 'scoped memory for tpu_custom_call.1']
    %7 = vsyncpa [#allocation3], 0
    %8 = vsyncpa [#allocation5], 0
    // Predicated region
    $region2: #{tpu_custom_call.1} parent=1 // pred_check
      _
    $region3: #{tpu_custom_call.1} parent=1 // pred_check_branch
      %10 = sbr.rel (0) target = $region5
    $region4: #{tpu_custom_call.1} parent=1 // pred_region
      %s12 = ssub.s32 256, 256
      %13 = vsyncadd [#allocation3], %s12
      %s15 = sshll.u32 [#allocation2], 4
      %s16 = int_to_ptr.vmem [resolvable:$true] %s15
      %18 = dma.hbm_to_vmem [thread:$0]  %s0, 256, %s16, [#allocation3]
    $region5: #{tpu_custom_call.1} parent=1 // pred_fallthru
      _
    // Predicated region
    $region6: #{tpu_custom_call.1} parent=1 // pred_check
      _
    $region7: #{tpu_custom_call.1} parent=1 // pred_check_branch
      %20 = sbr.rel (0) target = $region9
    $region8: #{tpu_custom_call.1} parent=1 // pred_region
      %s22 = ssub.s32 256, 256
      %23 = vsyncadd [#allocation5], %s22
      %s25 = sshll.u32 [#allocation4], 4
      %s26 = int_to_ptr.vmem [resolvable:$true] %s25
      %28 = dma.hbm_to_vmem [thread:$0]  %s1, 256, %s26, [#allocation5]
    $region9: #{tpu_custom_call.1} parent=1 // pred_fallthru
      _
    // Predicated region
    $region10: #{tpu_custom_call.1} parent=1 // pred_check
      _
    $region11: #{tpu_custom_call.1} parent=1 // pred_check_branch
      %30 = sbr.rel (0) target = $region13
    $region12: #{tpu_custom_call.1} parent=1 // pred_region
      %31 = dma.done [#allocation3], 256
    $region13: #{tpu_custom_call.1} parent=1 // pred_fallthru
      _
    // Predicated region
    $region14: #{tpu_custom_call.1} parent=1 // pred_check
      _
    $region15: #{tpu_custom_call.1} parent=1 // pred_check_branch
      %33 = sbr.rel (0) target = $region17
    $region16: #{tpu_custom_call.1} parent=1 // pred_region
      %34 = dma.done [#allocation5], 256
    $region17: #{tpu_custom_call.1} parent=1 // pred_fallthru
      _
    %v35 = vld [vmem:[#allocation2] sm:$0xff]
    %v36 = vld [vmem:[#allocation2 + $0x8] sm:$0xff]
    %v37 = vld [vmem:[#allocation4] sm:$0xff]
    %v38 = vld [vmem:[#allocation4 + $0x8] sm:$0xff]
    %vm39 = vcmp.ge.f32.partialorder %v35, %v37
    %vm40 = vcmp.ge.f32.partialorder %v36, %v38
    %vm41 = vcmp.ne.f32.partialorder %v35, %v37
    %vm42 = vcmp.ne.f32.partialorder %v36, %v38
    %vm43 = vmor %vm39, %vm41
    %vm44 = vmor %vm40, %vm42
    %v45 = vsel %vm43, 1, 0
    %v46 = vsel %vm44, 1, 0
    %47 = vst [vmem:[%s2] sm:$0xff] %v45
    %48 = vst [vmem:[%s2 + $0x8] sm:$0xff] %v46
    // Predicated region
    $region18: #{tpu_custom_call.1} parent=1 // pred_check
      _
    $region19: #{tpu_custom_call.1} parent=1 // pred_check_branch
      %50 = sbr.rel (0) target = $region21
    $region20: #{tpu_custom_call.1} parent=1 // pred_region
      _
    $region21: #{tpu_custom_call.1} parent=1 // pred_fallthru
      _
    // Predicated region
    $region22: #{tpu_custom_call.1} parent=1 // pred_check
      _
    $region23: #{tpu_custom_call.1} parent=1 // pred_check_branch
      %52 = sbr.rel (0) target = $region25
    $region24: #{tpu_custom_call.1} parent=1 // pred_region
      _
    $region25: #{tpu_custom_call.1} parent=1 // pred_fallthru
      _
    %53 = vsyncpa [#allocation3], 1
    %54 = vsyncpa [#allocation5], 1

</llo_original>
